<compile_context>
chip_gen: v7x
topology: tpu7x:2x2x1
jax: 0.10.0
libtpu: 0.0.40
codegen_flags: <defaults>
</compile_context>

<pallas_src>
import functools

import jax
import jax.numpy as jnp
from jax.experimental import pallas as pl
from jax.experimental.pallas import tpu as pltpu

INPUT_SIZE = 10
OUTPUT_SIZE = 5
BATCH_SIZE = 10

_SUBLANE = 8        # f32 sublane granularity
_LANE = 128         # lane width
_TILE_ROWS = 512    # row tile for the large-N (v7x megacore) path
_TILE_THRESHOLD = 1024  # below this many flattened rows, stay grid-free


def _round_up(n, m):
    return ((n + m - 1) // m) * m


# --------------------------------------------------------------------------
# One-time weight preparation (hoists transpose + padding off the call path)
# --------------------------------------------------------------------------
def prepare_weight(weight):
    """weight: (out, in) as in nn.Linear -> padded (IN_pad, OUT_pad) = W.T."""
    out_dim, in_dim = weight.shape
    in_pad = _round_up(in_dim, _LANE)
    out_pad = _round_up(out_dim, _LANE)
    return jnp.pad(weight.T, ((0, in_pad - in_dim), (0, out_pad - out_dim)))


# --------------------------------------------------------------------------
# Kernels
# --------------------------------------------------------------------------
def _make_flat_kernel(rows, in_dim):
    """Grid-free kernel: whole arrays resident in VMEM, one MXU matmul.

    x_ref:    (rows, in_dim)      unpadded activations (whole array in VMEM)
    wt_ref:   (in_pad, out_pad)   W.T, zero padded (prepared once)
    o_ref:    (rows_pad, out_pad) lane-dense output slab
    xpad_ref: (rows_pad, in_pad)  VMEM scratch, zero-extended copy of x
    """
    def kernel(x_ref, wt_ref, o_ref, xpad_ref):
        xpad_ref[...] = jnp.zeros_like(xpad_ref)          # zero pad lanes/rows
        xpad_ref[0:rows, 0:in_dim] = x_ref[...]
        o_ref[...] = jnp.dot(
            xpad_ref[...], wt_ref[...], preferred_element_type=jnp.float32
        ).astype(o_ref.dtype)
    return kernel


def _make_tiled_kernel(in_dim):
    """Row-tiled kernel for large flattened batches (v7x megacore sharding).

    x_ref:    (tile_rows, in_dim)   one row tile (block rows == tile rows)
    wt_ref:   (in_pad, out_pad)     resident across the whole grid
    o_ref:    (tile_rows, out_pad)
    xpad_ref: (tile_rows, in_pad)   VMEM scratch (zeroed each step: correct
                                    regardless of how the parallel axis is
                                    split across TensorCores)
    """
    def kernel(x_ref, wt_ref, o_ref, xpad_ref):
        xpad_ref[...] = jnp.zeros_like(xpad_ref)
        xpad_ref[:, 0:in_dim] = x_ref[...]
        o_ref[...] = jnp.dot(
            xpad_ref[...], wt_ref[...], preferred_element_type=jnp.float32
        ).astype(o_ref.dtype)
    return kernel


# --------------------------------------------------------------------------
# pallas_call builders (traced inside jit; all shapes static at trace time)
# --------------------------------------------------------------------------
def _forward_flat(x, wt_pad):
    """Single grid-free matmul: (rows, in) -> (rows_pad, out_pad) slab."""
    rows, in_dim = x.shape
    in_pad, out_pad = wt_pad.shape
    rows_pad = _round_up(max(rows, _SUBLANE), _SUBLANE)
    out_dim_est = OUTPUT_SIZE
    return pl.pallas_call(
        _make_flat_kernel(rows, in_dim),
        out_shape=jax.ShapeDtypeStruct((rows_pad, out_pad), x.dtype),
        in_specs=[
            pl.BlockSpec(memory_space=pltpu.MemorySpace.VMEM),
            pl.BlockSpec(memory_space=pltpu.MemorySpace.VMEM),
        ],
        out_specs=pl.BlockSpec(memory_space=pltpu.MemorySpace.VMEM),
        scratch_shapes=[pltpu.VMEM((rows_pad, in_pad), jnp.float32)],
        cost_estimate=pl.CostEstimate(
            flops=2 * rows * in_dim * out_dim_est,
            transcendentals=0,
            bytes_accessed=4 * (rows * in_dim + in_pad * out_pad
                                + rows_pad * out_pad),
        ),
    )(x, wt_pad)


def _forward_tiled(x, wt_pad, tile_rows=_TILE_ROWS):
    """Row-tiled path for large flattened batches (thousands of rows)."""
    rows, in_dim = x.shape
    in_pad, out_pad = wt_pad.shape
    rows_pad = _round_up(rows, tile_rows)
    if rows_pad != rows:
        # Single pad amortized over thousands of rows (off the per-sample path).
        x = jnp.pad(x, ((0, rows_pad - rows), (0, 0)))
    grid = (rows_pad // tile_rows,)
    out_dim_est = OUTPUT_SIZE
    return pl.pallas_call(
        _make_tiled_kernel(in_dim),
        out_shape=jax.ShapeDtypeStruct((rows_pad, out_pad), x.dtype),
        grid=grid,
        in_specs=[
            pl.BlockSpec((tile_rows, in_dim), lambda i: (i, 0)),
            pl.BlockSpec((in_pad, out_pad), lambda i: (0, 0)),  # resident W
        ],
        out_specs=pl.BlockSpec((tile_rows, out_pad), lambda i: (i, 0)),
        scratch_shapes=[pltpu.VMEM((tile_rows, in_pad), jnp.float32)],
        compiler_params=pltpu.CompilerParams(
            dimension_semantics=("parallel",)
        ),
        cost_estimate=pl.CostEstimate(
            flops=2 * rows * in_dim * out_dim_est,
            transcendentals=0,
            bytes_accessed=4 * (rows * in_dim + in_pad * out_pad
                                + rows_pad * out_pad),
        ),
    )(x, wt_pad)


# --------------------------------------------------------------------------
# Forward wrappers (return lane-dense padded slabs; crop at the consumer)
# --------------------------------------------------------------------------
@jax.jit
def hebbian_forward_padded(x, wt_pad):
    """x: (B, in) -> (B_pad, 128) padded slab; slab[:B, :out] == x @ W.T."""
    return _forward_flat(x, wt_pad)


@jax.jit
def hebbian_forward_many_padded(xs, wt_pad):
    """xs: (N, B, in) -> (rows_pad, 128) slab; slab[:N*B, :out] = flat fwd.

    Small N*B: one grid-free matmul (no per-grid-step overhead).
    Large N*B: 512-row 'parallel' tiles so v7x's two TensorCores both work.
    """
    n, b, in_dim = xs.shape
    x_flat = xs.reshape(n * b, in_dim)   # contiguous reshape, essentially free
    if n * b < _TILE_THRESHOLD:
        return _forward_flat(x_flat, wt_pad)
    return _forward_tiled(x_flat, wt_pad)


# --------------------------------------------------------------------------
# Demo / self-check
# --------------------------------------------------------------------------
if __name__ == "__main__":
    key = jax.random.PRNGKey(0)
    k_x, k_w, k_xs, k_big = jax.random.split(key, 4)

    # Deterministic inputs / parameters (nn.init.normal_(mean=0, std=0.01)).
    x = jax.random.normal(k_x, (BATCH_SIZE, INPUT_SIZE), dtype=jnp.float32)
    weight = 0.01 * jax.random.normal(
        k_w, (OUTPUT_SIZE, INPUT_SIZE), dtype=jnp.float32
    )

    # One-time setup: transpose + pad the weight (off the per-call path).
    wt_pad = prepare_weight(weight)

    # --- single forward (grid-free, no wrapper-side pad) ---------------------
    out_slab = jax.block_until_ready(hebbian_forward_padded(x, wt_pad))
    out = out_slab[:BATCH_SIZE, :OUTPUT_SIZE]          # consumer-side crop
    ref = x @ weight.T
    assert out.shape == (BATCH_SIZE, OUTPUT_SIZE)
    assert jnp.allclose(out, ref, atol=1e-5, rtol=1e-5)

    # --- many forwards, small N: flattened into ONE grid-free matmul --------
    N = 4
    xs = jax.random.normal(k_xs, (N, BATCH_SIZE, INPUT_SIZE), dtype=jnp.float32)
    outs_slab = jax.block_until_ready(hebbian_forward_many_padded(xs, wt_pad))
    outs = outs_slab[: N * BATCH_SIZE, :OUTPUT_SIZE].reshape(
        N, BATCH_SIZE, OUTPUT_SIZE
    )
    refs = jnp.einsum("nbi,oi->nbo", xs, weight)
    assert jnp.allclose(outs, refs, atol=1e-5, rtol=1e-5)

    # --- many forwards, large N: 512-row 'parallel' tiles (v7x path) --------
    NBIG = 256                       # 2560 flattened rows = 5 x 512-row tiles
    xs_big = jax.random.normal(
        k_big, (NBIG, BATCH_SIZE, INPUT_SIZE), dtype=jnp.float32
    )
    big_slab = jax.block_until_ready(
        hebbian_forward_many_padded(xs_big, wt_pad)
    )
    big = big_slab[: NBIG * BATCH_SIZE, :OUTPUT_SIZE].reshape(
        NBIG, BATCH_SIZE, OUTPUT_SIZE
    )
    refs_big = jnp.einsum("nbi,oi->nbo", xs_big, weight)
    assert jnp.allclose(big, refs_big, atol=1e-5, rtol=1e-5)

    # TODO(synk): hebbian_update / normalize_weights are training-time,
    # in-place weight mutations (not part of forward()); not implemented.
    print("KERNEL_OK")
</pallas_src>

<mosaic_0001>
module attributes {stable_mosaic.version = 11 : i64} {
  func.func @kernel(%arg0: memref<10x10xf32, #tpu.memory_space<vmem>>, %arg1: memref<128x128xf32, #tpu.memory_space<vmem>>, %arg2: memref<16x128xf32, #tpu.memory_space<vmem>>, %arg3: memref<16x128xf32, #tpu.memory_space<vmem>>) attributes {dimension_semantics = [], scalar_prefetch = 0 : i64, scratch_operands = 1 : i64, tpu.core_type = #tpu.core_type<tc>} {
    %cst = arith.constant 0.000000e+00 : f32
    %0 = vector.broadcast %cst : f32 to vector<16x128xf32>
    %c0 = arith.constant 0 : index
    %c0_0 = arith.constant 0 : index
    %1 = vector.load %arg3[%c0, %c0_0] : memref<16x128xf32, #tpu.memory_space<vmem>>, vector<16x128xf32>
    tpu.vector_store %arg3[%c0, %c0_0], %0 {strides = array<i32>} : memref<16x128xf32, #tpu.memory_space<vmem>>, vector<16x128xf32>,
    %c0_1 = arith.constant 0 : index
    %c0_2 = arith.constant 0 : index
    %2 = vector.load %arg0[%c0_1, %c0_2] : memref<10x10xf32, #tpu.memory_space<vmem>>, vector<10x10xf32>
    %c0_3 = arith.constant 0 : index
    %c0_4 = arith.constant 0 : index
    %3 = vector.load %arg3[%c0_3, %c0_4] : memref<16x128xf32, #tpu.memory_space<vmem>>, vector<10x10xf32>
    tpu.vector_store %arg3[%c0_3, %c0_4], %2 {strides = array<i32>} : memref<16x128xf32, #tpu.memory_space<vmem>>, vector<10x10xf32>,
    %c0_5 = arith.constant 0 : index
    %c0_6 = arith.constant 0 : index
    %4 = vector.load %arg3[%c0_5, %c0_6] : memref<16x128xf32, #tpu.memory_space<vmem>>, vector<16x128xf32>
    %c0_7 = arith.constant 0 : index
    %c0_8 = arith.constant 0 : index
    %5 = vector.load %arg1[%c0_7, %c0_8] : memref<128x128xf32, #tpu.memory_space<vmem>>, vector<128x128xf32>
    %cst_9 = arith.constant dense<0.000000e+00> : vector<16x128xf32>
    %6 = tpu.matmul %4, %5, %cst_9 {dimension_numbers = #tpu.dot_dimension_numbers<[1], [0], [0], [1], [0, 0, 1, 1], [], []>} : vector<16x128xf32>, vector<128x128xf32>, vector<16x128xf32> -> vector<16x128xf32>
    %c0_10 = arith.constant 0 : index
    %c0_11 = arith.constant 0 : index
    %7 = vector.load %arg2[%c0_10, %c0_11] : memref<16x128xf32, #tpu.memory_space<vmem>>, vector<16x128xf32>
    tpu.vector_store %arg2[%c0_10, %c0_11], %6 {strides = array<i32>} : memref<16x128xf32, #tpu.memory_space<vmem>>, vector<16x128xf32>,
    return
  }
}

</mosaic_0001>

<llo_original>
// kernel: hebbian_forward_padded.1
$region0: #{hebbian_forward_padded.1}
  #allocation0 [shape = 'u32[]', space=smem, size = 0x4, offset = 0x4, fixed_abs, tag = 'smem constant byte address 0x4 - core index']
  #allocation1 [shape = 'u32[144,128]{1,0:T(1,128)}', space=vmem, size = 0x12000, scoped, tag = 'internal scratch']
  #allocation2 [shape = 'f32[16,128]{1,0:T(8,128)}', space=vmem, size = 0x2000, scoped, tag = 'scratch operand']
  %s0 = inlined_call_operand.hbm [shape: f32[10,10], index: 0, kind: input, shape index: {}]
  %s1 = inlined_call_operand.hbm [shape: f32[128,128], index: 1, kind: input, shape index: {}]
  %s2 = inlined_call_operand.hbm [shape: f32[16,128], index: 2, kind: output, shape index: {}]
  %s3 = sld [smem:[#allocation0]]
  $region26: #{hebbian_forward_padded.1} parent=0
    _
  %s5 = ssub.s32 1, %s3
  %s6 = scalar_select 0, %s5, %s3
  $region1: #{hebbian_forward_padded.1} parent=0
    #allocation3 [shape = 'u8[8192]{0}', space=vmem, size = 0x2000, scoped, tag = 'input window, operand 0, single buffered']
    #allocation4 [shape = 's32[1]{0}', space=sflag, size = 0x4, scoped, tag = 'scoped memory for hebbian_forward_padded.1']
    #allocation5 [shape = 's32[1]{0}', space=sflag, size = 0x4, scoped, tag = 'scoped memory for hebbian_forward_padded.1']
    #allocation6 [shape = 'u8[65536]{0}', space=vmem, size = 0x10000, scoped, tag = 'input window, operand 1, single buffered']
    #allocation7 [shape = 's32[1]{0}', space=sflag, size = 0x4, scoped, tag = 'scoped memory for hebbian_forward_padded.1']
    #allocation8 [shape = 'u8[8192]{0}', space=vmem, size = 0x2000, scoped, tag = 'output window, operand 0, single buffered']
    %7 = vsyncpa [#allocation4], 0
    %8 = vsyncpa [#allocation7], 0
    %9 = vsyncpa [#allocation5], 0
    // Predicated region
    $region2: #{hebbian_forward_padded.1} parent=1 // pred_check
      _
    $region3: #{hebbian_forward_padded.1} parent=1 // pred_check_branch
      %11 = sbr.rel (0) target = $region5
    $region4: #{hebbian_forward_padded.1} parent=1 // pred_region
      %s13 = ssub.s32 256, 256
      %14 = vsyncadd [#allocation4], %s13
      %s15 = sshll.u32 [#allocation3], 4
      %s16 = int_to_ptr.vmem [resolvable:$true] %s15
      %21 = dma.hbm_to_vmem [thread:$0]  %s0, 256, %s16, [#allocation4], 128, 128, 8
    $region5: #{hebbian_forward_padded.1} parent=1 // pred_fallthru
      _
    // Predicated region
    $region6: #{hebbian_forward_padded.1} parent=1 // pred_check
      _
    $region7: #{hebbian_forward_padded.1} parent=1 // pred_check_branch
      %23 = sbr.rel (0) target = $region9
    $region8: #{hebbian_forward_padded.1} parent=1 // pred_region
      %s25 = ssub.s32 2048, 2048
      %26 = vsyncadd [#allocation7], %s25
      %s27 = sshll.u32 [#allocation6], 4
      %s28 = int_to_ptr.vmem [resolvable:$true] %s27
      %33 = dma.hbm_to_vmem [thread:$0]  %s1, 2048, %s28, [#allocation7], 128, 128, 8
    $region9: #{hebbian_forward_padded.1} parent=1 // pred_fallthru
      _
    // Predicated region
    $region10: #{hebbian_forward_padded.1} parent=1 // pred_check
      _
    $region11: #{hebbian_forward_padded.1} parent=1 // pred_check_branch
      %35 = sbr.rel (0) target = $region13
    $region12: #{hebbian_forward_padded.1} parent=1 // pred_region
      %36 = dma.done [#allocation4], 256
    $region13: #{hebbian_forward_padded.1} parent=1 // pred_fallthru
      _
    // Predicated region
    $region14: #{hebbian_forward_padded.1} parent=1 // pred_check
      _
    $region15: #{hebbian_forward_padded.1} parent=1 // pred_check_branch
      %38 = sbr.rel (0) target = $region17
    $region16: #{hebbian_forward_padded.1} parent=1 // pred_region
      %39 = dma.done [#allocation7], 2048
    $region17: #{hebbian_forward_padded.1} parent=1 // pred_fallthru
      _
    %40 = vst [vmem:[#allocation2] sm:$0xff] 0.0
    %41 = vst [vmem:[#allocation2 + $0x8] sm:$0xff] 0.0
    %v42 = vld [vmem:[#allocation3] sm:$0xff]
    %v43 = vld [vmem:[#allocation3 + $0x8] sm:$0x3]
    %vm44 = vcmask 80896
    %45 = vst.msk [vmem:[#allocation2] sm:$0xff] %vm44, %v42
    %vm46 = vcmask 74752
    %47 = vst.msk [vmem:[#allocation2 + $0x8] sm:$0x3] %vm46, %v43
    %v48 = vld [vmem:[#allocation2] sm:$0xff]
    %v49 = vld [vmem:[#allocation2 + $0x8] sm:$0xff]
    %v50 = vld [vmem:[#allocation6] sm:$0xff]
    %v51 = vld [vmem:[#allocation6 + $0x8] sm:$0xff]
    %v52 = vld [vmem:[#allocation6 + $0x10] sm:$0xff]
    %v53 = vld [vmem:[#allocation6 + $0x18] sm:$0xff]
    %v54 = vld [vmem:[#allocation6 + $0x20] sm:$0xff]
    %v55 = vld [vmem:[#allocation6 + $0x28] sm:$0xff]
    %v56 = vld [vmem:[#allocation6 + $0x30] sm:$0xff]
    %v57 = vld [vmem:[#allocation6 + $0x38] sm:$0xff]
    %v58 = vld [vmem:[#allocation6 + $0x40] sm:$0xff]
    %v59 = vld [vmem:[#allocation6 + $0x48] sm:$0xff]
    %v60 = vld [vmem:[#allocation6 + $0x50] sm:$0xff]
    %v61 = vld [vmem:[#allocation6 + $0x58] sm:$0xff]
    %v62 = vld [vmem:[#allocation6 + $0x60] sm:$0xff]
    %v63 = vld [vmem:[#allocation6 + $0x68] sm:$0xff]
    %v64 = vld [vmem:[#allocation6 + $0x70] sm:$0xff]
    %v65 = vld [vmem:[#allocation6 + $0x78] sm:$0xff]
    %66 = vmatprep.subr.mxu0 0.0
    %67 = vmatpush1.msra.mxu0 %v50
    %68 = vmatprep.subr.mxu0 0.0
    %69 = vmatpush1.msra.mxu0 %v51
    %70 = vmatprep.subr.mxu0 0.0
    %71 = vmatpush1.msra.mxu0 %v52
    %72 = vmatprep.subr.mxu0 0.0
    %73 = vmatpush1.msra.mxu0 %v53
    %74 = vmatprep.subr.mxu0 0.0
    %75 = vmatpush1.msra.mxu0 %v54
    %76 = vmatprep.subr.mxu0 0.0
    %77 = vmatpush1.msra.mxu0 %v55
    %78 = vmatprep.subr.mxu0 0.0
    %79 = vmatpush1.msra.mxu0 %v56
    %80 = vmatprep.subr.mxu0 0.0
    %81 = vmatpush1.msra.mxu0 %v57
    %82 = vmatprep.subr.mxu0 0.0
    %83 = vmatpush1.msra.mxu0 %v58
    %84 = vmatprep.subr.mxu0 0.0
    %85 = vmatpush1.msra.mxu0 %v59
    %86 = vmatprep.subr.mxu0 0.0
    %87 = vmatpush1.msra.mxu0 %v60
    %88 = vmatprep.subr.mxu0 0.0
    %89 = vmatpush1.msra.mxu0 %v61
    %90 = vmatprep.subr.mxu0 0.0
    %91 = vmatpush1.msra.mxu0 %v62
    %92 = vmatprep.subr.mxu0 0.0
    %93 = vmatpush1.msra.mxu0 %v63
    %94 = vmatprep.subr.mxu0 0.0
    %95 = vmatpush1.msra.mxu0 %v64
    %96 = vmatprep.subr.mxu0 0.0
    %97 = vmatpush1.msra.mxu0 %v65
    %98 = vmatprep.subr.mxu0 0.0
    %99 = vmatpush1.msra.mxu0 0.0
    %100 = vmatprep.subr.mxu0 0.0
    %101 = vmatpush1.msra.mxu0 0.0
    %102 = vmatprep.subr.mxu0 0.0
    %103 = vmatpush1.msra.mxu0 0.0
    %104 = vmatprep.subr.mxu0 0.0
    %105 = vmatpush1.msra.mxu0 0.0
    %106 = vmatprep.subr.mxu0 0.0
    %107 = vmatpush1.msra.mxu0 0.0
    %108 = vmatprep.subr.mxu0 0.0
    %109 = vmatpush1.msra.mxu0 0.0
    %110 = vmatprep.subr.mxu0 0.0
    %111 = vmatpush1.msra.mxu0 0.0
    %112 = vmatprep.subr.mxu0 0.0
    %113 = vmatpush1.msra.mxu0 0.0
    %114 = vmatprep.subr.mxu0 0.0
    %115 = vmatpush1.msra.mxu0 0.0
    %116 = vmatprep.subr.mxu0 0.0
    %117 = vmatpush1.msra.mxu0 0.0
    %118 = vmatprep.subr.mxu0 0.0
    %119 = vmatpush1.msra.mxu0 0.0
    %120 = vmatprep.subr.mxu0 0.0
    %121 = vmatpush1.msra.mxu0 0.0
    %122 = vmatprep.subr.mxu0 0.0
    %123 = vmatpush1.msra.mxu0 0.0
    %124 = vmatprep.subr.mxu0 0.0
    %125 = vmatpush1.msra.mxu0 0.0
    %126 = vmatprep.subr.mxu0 0.0
    %127 = vmatpush1.msra.mxu0 0.0
    %128 = vmatprep.subr.mxu0 0.0
    %129 = vmatpush1.msra.mxu0 0.0
    %130 = vmatprep.mubr.f32.mxu0 0.0
    %131 = vmatmul.mubr.f32.gmra.mrb[0].mxu0 %v48
    %v132 = vpop.f32.mrb[0].mxu0
    %v133 = vadd.f32 0.0, %v132
    %v134 = vpop.f32.mrb[0].mxu0
    %135 = vmatprep.mubr.f32.mxu0 0.0
    %136 = vmatmul.mubr.f32.gmra.mrb[0].mxu0 %v49
    %v137 = vpop.f32.mrb[0].mxu0
    %v138 = vadd.f32 0.0, %v137
    %v139 = vpop.f32.mrb[0].mxu0
    %140 = vdwg.mxu0
    %141 = vst [vmem:[#allocation8] sm:$0xff] %v133
    %142 = vst [vmem:[#allocation8 + $0x8] sm:$0xff] %v138
    // Predicated region
    $region18: #{hebbian_forward_padded.1} parent=1 // pred_check
      _
    $region19: #{hebbian_forward_padded.1} parent=1 // pred_check_branch
      %144 = sbr.rel (0) target = $region21
    $region20: #{hebbian_forward_padded.1} parent=1 // pred_region
      %s146 = ssub.s32 256, 256
      %147 = vsyncadd [#allocation5], %s146
      %s148 = sshll.u32 [#allocation8], 4
      %s149 = int_to_ptr.vmem [resolvable:$true] %s148
      %154 = dma.vmem_to_hbm [thread:$0]  %s149, 256, %s2, [#allocation5], 128, 128, 8
    $region21: #{hebbian_forward_padded.1} parent=1 // pred_fallthru
      _
    // Predicated region
    $region22: #{hebbian_forward_padded.1} parent=1 // pred_check
      _
    $region23: #{hebbian_forward_padded.1} parent=1 // pred_check_branch
      %156 = sbr.rel (0) target = $region25
    $region24: #{hebbian_forward_padded.1} parent=1 // pred_region
      %157 = dma.done [#allocation5], 256
    $region25: #{hebbian_forward_padded.1} parent=1 // pred_fallthru
      _
    %158 = vsyncpa [#allocation4], 1
    %159 = vsyncpa [#allocation7], 1
    %160 = vsyncpa [#allocation5], 1

</llo_original>
